<compile_context>
chip_gen: v6e
topology: v6e:2x2x1
jax: 0.10.0
libtpu: 0.0.40
codegen_flags: <defaults>
</compile_context>

<pallas_src>
import functools
import math

import jax
import jax.numpy as jnp
from jax.experimental import pallas as pl
from jax.experimental.pallas import tpu as pltpu

_LANES = 128
_TARGET_BLOCK_BYTES = 1 << 20      # ~1 MiB per block (sweet spot of HBM roofline)
_PALLAS_MIN_ELEMS = 256 * 1024     # below this, a fused XLA kernel is already optimal


def _prediction_kernel(bias_ref, x_ref, o_ref, *, use_bias: bool, task: str):
    # Upcast to f32 for the elementwise math (v5e has no bf16 VPU/EUP path);
    # the kernel is HBM-bound so this is free.
    out = x_ref[...].astype(jnp.float32)
    if use_bias:
        out = out + bias_ref[0]            # scalar broadcast from SMEM
    if task == "binary":
        out = jax.nn.sigmoid(out)          # VPU/EUP elementwise
    o_ref[...] = out.astype(o_ref.dtype)


def prediction_layer(x: jax.Array,
                     bias: jax.Array | None = None,
                     *,
                     task: str = "binary",
                     use_bias: bool = True,
                     block_rows: int | None = None,
                     min_pallas_elems: int = _PALLAS_MIN_ELEMS) -> jax.Array:
    """Pallas implementation of PredictionLayer.forward.

    x    : float array of any shape (typically (batch, 1)).
    bias : (1,) float array (ignored if use_bias=False).
    """
    if task not in ("binary", "multiclass", "regression"):
        raise ValueError("task must be binary, multiclass or regression")

    orig_shape = x.shape
    orig_dtype = x.dtype
    n = math.prod(orig_shape) if orig_shape else 1

    if use_bias:
        if bias is None:
            raise ValueError("bias must be provided when use_bias=True")
        bias32 = jnp.asarray(bias, dtype=jnp.float32).reshape((1,))
    else:
        bias32 = jnp.zeros((1,), dtype=jnp.float32)

    # Fallback path: small inputs or a flattened size that is not a multiple
    # of 128 lanes.  One fused XLA elementwise kernel, zero extra HBM copies
    # (no pad, no slice) -- this is the hot path for deepctr's (batch, 1).
    if n < max(min_pallas_elems, _LANES) or n % _LANES != 0:
        out = x.astype(jnp.float32)
        if use_bias:
            out = out + bias32[0]
        if task == "binary":
            out = jax.nn.sigmoid(out)
        return out.astype(orig_dtype)

    # ---- Pallas path: lane-dense (rows, 128) view, no padding copies. ----
    rows = n // _LANES
    itemsize = jnp.dtype(orig_dtype).itemsize
    sub = max(8, 32 // itemsize)                     # 8 f32, 16 bf16, 32 int8/fp8

    if block_rows is None:
        block_rows = max(sub, _TARGET_BLOCK_BYTES // (_LANES * itemsize))

    if rows >= 2 * sub:
        # Cap so there are >= 2 grid steps (both v7x TensorCores stay busy);
        # round down to the dtype sublane multiple for unmasked full-width vst.
        tb = min(block_rows, pl.cdiv(rows, 2))
        tb = max(sub, (tb // sub) * sub)
    else:
        tb = rows                                    # single full-extent block

    grid = (pl.cdiv(rows, tb),)                      # Pallas masks the ragged tail
    x2d = x.reshape(rows, _LANES)                    # multiple of 128 -> free reshape

    kernel = functools.partial(_prediction_kernel, use_bias=use_bias, task=task)

    out2d = pl.pallas_call(
        kernel,
        out_shape=jax.ShapeDtypeStruct((rows, _LANES), orig_dtype),
        grid=grid,
        in_specs=[
            pl.BlockSpec(memory_space=pltpu.SMEM),             # scalar bias
            pl.BlockSpec((tb, _LANES), lambda i: (i, 0)),       # lane-dense tiles
        ],
        out_specs=pl.BlockSpec((tb, _LANES), lambda i: (i, 0)),
        compiler_params=pltpu.CompilerParams(
            dimension_semantics=("parallel",),       # shard grid across TCs on v7x
        ),
    )(bias32, x2d)

    return out2d.reshape(orig_shape)


def prediction_layer_ref(x, bias, *, task="binary", use_bias=True):
    out = x
    if use_bias:
        out = out + bias[0]
    if task == "binary":
        out = jax.nn.sigmoid(out)
    return out


if __name__ == "__main__":
    key = jax.random.PRNGKey(0)
    k1, k2, k3, k4 = jax.random.split(key, 4)

    bias = jnp.full((1,), 0.25, dtype=jnp.float32)  # nonzero to exercise bias path

    # 1) Typical deepctr shape (batch, units=1): small + lane-ragged ->
    #    fused-XLA fallback path (semantics check).
    x1 = jax.random.normal(k1, (256, 1), dtype=jnp.float32)
    out1 = jax.block_until_ready(prediction_layer(x1, bias, task="binary"))
    ref1 = prediction_layer_ref(x1, bias, task="binary")
    assert out1.shape == x1.shape and out1.dtype == x1.dtype
    assert jnp.allclose(out1, ref1, atol=1e-6, rtol=1e-6)

    # 2) Lane-aligned f32 input through the Pallas kernel with a multi-step
    #    grid (threshold lowered to force the Pallas path at small size).
    x2 = jax.random.normal(k2, (64, 128), dtype=jnp.float32)
    out2 = jax.block_until_ready(
        prediction_layer(x2, bias, task="binary",
                         block_rows=16, min_pallas_elems=0))
    ref2 = prediction_layer_ref(x2, bias, task="binary")
    assert out2.shape == x2.shape and out2.dtype == x2.dtype
    assert jnp.allclose(out2, ref2, atol=1e-6, rtol=1e-6)

    # 3) Ragged row count (136 rows -> partial trailing block masked by
    #    Pallas), regression task (identity + bias).
    x3 = jax.random.normal(k3, (136, 128), dtype=jnp.float32)
    out3 = jax.block_until_ready(
        prediction_layer(x3, bias, task="regression",
                         block_rows=32, min_pallas_elems=0))
    ref3 = prediction_layer_ref(x3, bias, task="regression")
    assert jnp.allclose(out3, ref3, atol=1e-6, rtol=1e-6)

    # 4) bf16 input (dtype-aware sublane multiple = 16), no bias, binary.
    x4 = jax.random.normal(k4, (128, 128), dtype=jnp.bfloat16)
    out4 = jax.block_until_ready(
        prediction_layer(x4, None, task="binary", use_bias=False,
                         block_rows=32, min_pallas_elems=0))
    ref4 = prediction_layer_ref(x4.astype(jnp.float32),
                                jnp.zeros((1,), jnp.float32),
                                task="binary", use_bias=False)
    assert out4.dtype == jnp.bfloat16
    assert jnp.allclose(out4.astype(jnp.float32), ref4, atol=2e-2, rtol=2e-2)

    print("KERNEL_OK")
</pallas_src>

<mosaic_0001>
module attributes {stable_mosaic.version = 11 : i64} {
  func.func @_prediction_kernel(%arg0: i32, %arg1: memref<1xf32, #tpu.memory_space<smem>>, %arg2: memref<16x128xf32, #tpu.memory_space<vmem>>, %arg3: memref<16x128xf32, #tpu.memory_space<vmem>>) attributes {dimension_semantics = [#tpu.dimension_semantics<parallel>], iteration_bounds = array<i64: 4>, scalar_prefetch = 0 : i64, scratch_operands = 0 : i64, tpu.core_type = #tpu.core_type<tc>, window_params = [{transform_indices = @transform_0, window_bounds = array<i64: 1>}, {transform_indices = @transform_1, window_bounds = array<i64: 16, 128>}, {transform_indices = @transform_2, window_bounds = array<i64: 16, 128>}]} {
    %c0 = arith.constant 0 : index
    %c0_0 = arith.constant 0 : index
    %0 = vector.load %arg2[%c0, %c0_0] : memref<16x128xf32, #tpu.memory_space<vmem>>, vector<16x128xf32>
    %c0_1 = arith.constant 0 : index
    %1 = memref.load %arg1[%c0_1] : memref<1xf32, #tpu.memory_space<smem>>
    %2 = vector.broadcast %1 : f32 to vector<16x128xf32>
    %3 = arith.addf %0, %2 : vector<16x128xf32>
    %4 = arith.negf %3 : vector<16x128xf32>
    %5 = math.exp %4 : vector<16x128xf32>
    %cst = arith.constant 1.000000e+00 : f32
    %6 = vector.broadcast %cst : f32 to vector<16x128xf32>
    %7 = arith.addf %6, %5 : vector<16x128xf32>
    %8 = arith.divf %6, %7 : vector<16x128xf32>
    %c0_2 = arith.constant 0 : index
    %c0_3 = arith.constant 0 : index
    %9 = vector.load %arg3[%c0_2, %c0_3] : memref<16x128xf32, #tpu.memory_space<vmem>>, vector<16x128xf32>
    tpu.vector_store %arg3[%c0_2, %c0_3], %8 {strides = array<i32>} : memref<16x128xf32, #tpu.memory_space<vmem>>, vector<16x128xf32>,
    return
  }
  func.func @transform_0(%arg0: i32) -> i32 {
    %c0_i32 = arith.constant 0 : i32
    %c0_i32_0 = arith.constant 0 : i32
    return %c0_i32 : i32
  }
  func.func @transform_1(%arg0: i32) -> (i32, i32) {
    %c0_i32 = arith.constant 0 : i32
    %c0_i32_0 = arith.constant 0 : i32
    return %arg0, %c0_i32 : i32, i32
  }
  func.func @transform_2(%arg0: i32) -> (i32, i32) {
    %c0_i32 = arith.constant 0 : i32
    %c0_i32_0 = arith.constant 0 : i32
    return %arg0, %c0_i32 : i32, i32
  }
}

</mosaic_0001>

<llo_original>
// kernel: tpu_custom_call.1
$region0: #{tpu_custom_call.1}
  #allocation0 [shape = 'u32[]', space=smem, size = 0x4, offset = 0x4, fixed_abs, tag = 'smem constant byte address 0x4 - core index']
  #allocation1 [shape = 'u32[144,128]{1,0:T(1,128)}', space=vmem, size = 0x12000, scoped, tag = 'internal scratch']
  #allocation2 [shape = 'f32[1]{0:T(128)S(6)}', space=smem, size = 0x200, scoped, tag = 'scoped memory for tpu_custom_call.1']
  %s0 = inlined_call_operand.<no memory space> [shape: f32[1], index: 0, kind: input, shape index: {}]
  %s1 = inlined_call_operand.hbm [shape: f32[64,128], index: 1, kind: input, shape index: {}]
  %s2 = inlined_call_operand.hbm [shape: f32[64,128], index: 2, kind: output, shape index: {}]
  %s3 = sld [smem:[#allocation0]]
  $region45: #{tpu_custom_call.1} parent=0
    _
  %s5 = ssub.s32 1, %s3
  %s6 = scalar_select 0, %s5, %s3
  %7 = sst [smem:[#allocation2]] %s0
  $region1: #{tpu_custom_call.1} parent=0
    #allocation3 [shape = 'u8[16384]{0}', space=vmem, size = 0x4000, scoped, tag = 'input window, operand 1']
    #allocation4 [shape = 's32[2]{0}', space=sflag, size = 0x8, scoped, tag = 'scoped memory for tpu_custom_call.1']
    #allocation5 [shape = 's32[2]{0}', space=sflag, size = 0x8, scoped, tag = 'scoped memory for tpu_custom_call.1']
    #allocation6 [shape = 'u8[16384]{0}', space=vmem, size = 0x4000, scoped, tag = 'output window, operand 0']
    %8 = vsyncpa [#allocation4], 0
    %s9 = scalar_lea.sflag [#allocation4], 1
    %10 = vsyncpa %s9, 0
    %11 = vsyncpa [#allocation5], 0
    %s12 = scalar_lea.sflag [#allocation5], 1
    %13 = vsyncpa %s12, 0
    loop: start=0, step=1, limit=6
    $region2: #{tpu_custom_call.1} parent=1 // loop_pre_header
      _
    $region3: #{tpu_custom_call.1} parent=1 // loop_header
      %s15 = sphi 0, %s19
      %p16 = scmp.ge.s32.totalorder %s15, 6
      %s23 = sphi 0, %s23
      %s25 = sphi 0, %s23
      %s26 = sphi 0, %s25
      %s40 = sphi 0, %s26
      %s46 = sphi 0, %s48
      %s49 = sphi 0, %s46
      %s50 = sphi 0, %s49
      %s66 = sphi 0, %s50
      %s72 = sphi 0, %s74
      %s75 = sphi 0, %s72
      %s76 = sphi 0, %s75
      %s92 = sphi 0, %s76
    $region4: #{tpu_custom_call.1} parent=1 // loop_header_branch
      %18 = sbr.rel (%p16) target = $region8
    $region5: #{tpu_custom_call.1} parent=1 // loop_body
      %s20 = ssub.s32 %s15, 1
      %s21 = ssub.s32 %s15, 2
      %s22 = sadd.s32 %s15, 1
      %s24 = sadd.s32 %s23, 1
      %p27 = scmp.eq.s32.totalorder %s15, 3
      %p28 = scmp.ne.s32.totalorder %s23, %s25
      %p29 = scmp.eq.s32.totalorder %s15, 0
      %p30 = por %p28, %p29
      %p31 = scmp.ne.s32.totalorder %s23, %s25
      %p32 = scmp.eq.s32.totalorder %s20, 3
      %p33 = por %p31, %p32
      %p34 = scmp.ne.s32.totalorder %s25, %s26
      %p35 = scmp.eq.s32.totalorder %s20, 0
      %p36 = por %p34, %p35
      %p37 = scmp.ne.s32.totalorder %s25, %s26
      %p38 = scmp.eq.s32.totalorder %s21, 3
      %p39 = por %p37, %p38
      %p41 = scmp.ne.s32.totalorder %s26, %s40
      %p42 = scmp.eq.s32.totalorder %s21, 0
      %p43 = por %p41, %p42
      %s44 = ssub.s32 %s15, %s22
      %p45 = scmp.eq.s32.totalorder %s44, 0
      %s47 = sadd.s32 %s46, 1
      %s48 = scalar_select %p45, %s46, %s47
      %p51 = pneg %p45
      %p52 = scmp.eq.s32.totalorder %s15, 3
      %p53 = por %p51, %p52
      %p54 = scmp.ne.s32.totalorder %s46, %s49
      %p55 = scmp.eq.s32.totalorder %s15, 0
      %p56 = por %p54, %p55
      %p57 = scmp.ne.s32.totalorder %s46, %s49
      %p58 = scmp.eq.s32.totalorder %s20, 3
      %p59 = por %p57, %p58
      %p60 = scmp.ne.s32.totalorder %s49, %s50
      %p61 = scmp.eq.s32.totalorder %s20, 0
      %p62 = por %p60, %p61
      %p63 = scmp.ne.s32.totalorder %s49, %s50
      %p64 = scmp.eq.s32.totalorder %s21, 3
      %p65 = por %p63, %p64
      %p67 = scmp.ne.s32.totalorder %s50, %s66
      %p68 = scmp.eq.s32.totalorder %s21, 0
      %p69 = por %p67, %p68
      %s70 = ssub.s32 %s15, %s22
      %p71 = scmp.eq.s32.totalorder %s70, 0
      %s73 = sadd.s32 %s72, 1
      %s74 = scalar_select %p71, %s72, %s73
      %p77 = pneg %p71
      %p78 = scmp.eq.s32.totalorder %s15, 3
      %p79 = por %p77, %p78
      %p80 = scmp.ne.s32.totalorder %s72, %s75
      %p81 = scmp.eq.s32.totalorder %s15, 0
      %p82 = por %p80, %p81
      %p83 = scmp.ne.s32.totalorder %s72, %s75
      %p84 = scmp.eq.s32.totalorder %s20, 3
      %p85 = por %p83, %p84
      %p86 = scmp.ne.s32.totalorder %s75, %s76
      %p87 = scmp.eq.s32.totalorder %s20, 0
      %p88 = por %p86, %p87
      %p89 = scmp.ne.s32.totalorder %s75, %s76
      %p90 = scmp.eq.s32.totalorder %s21, 3
      %p91 = por %p89, %p90
      %p93 = scmp.ne.s32.totalorder %s76, %s92
      %p94 = scmp.eq.s32.totalorder %s21, 0
      %p95 = por %p93, %p94
      %p96 = scmp.le.s32.totalorder 1, %s15
      %p97 = scmp.lt.s32.totalorder %s15, 5
      %p98 = pnand %p96, %p97
      %p99 = pneg %p98
      // Predicated region
      $region9: #{tpu_custom_call.1} parent=5 // pred_check
        _
      $region10: #{tpu_custom_call.1} parent=5 // pred_check_branch
        %101 = sbr.rel (%p98) target = $region12
      $region11: #{tpu_custom_call.1} parent=5 // pred_region
        %s102 = ssub.s32 %s15, 1
        // Predicated region
        $region13: #{tpu_custom_call.1} parent=11 // pred_check
          %p103 = pneg %p36
        $region14: #{tpu_custom_call.1} parent=11 // pred_check_branch
          %105 = sbr.rel (%p103) target = $region16
        $region15: #{tpu_custom_call.1} parent=11 // pred_region
          _
        $region16: #{tpu_custom_call.1} parent=11 // pred_fallthru
          _
      $region12: #{tpu_custom_call.1} parent=5 // pred_fallthru
        _
      %p106 = scmp.lt.s32.totalorder %s15, 4
      // Predicated region
      $region17: #{tpu_custom_call.1} parent=5 // pred_check
        %p107 = pneg %p106
      $region18: #{tpu_custom_call.1} parent=5 // pred_check_branch
        %109 = sbr.rel (%p107) target = $region20
      $region19: #{tpu_custom_call.1} parent=5 // pred_region
        // Predicated region
        $region21: #{tpu_custom_call.1} parent=19 // pred_check
          %p110 = pneg %p56
        $region22: #{tpu_custom_call.1} parent=19 // pred_check_branch
          %112 = sbr.rel (%p110) target = $region24
        $region23: #{tpu_custom_call.1} parent=19 // pred_region
          %s113 = sand.u32 %s46, 1
          %s114 = scalar_lea.sflag [#allocation4], %s113
          %s115 = sand.u32 %s46, 1
          %s116 = smul.addr %s115, 16
          %s117 = scalar_lea.vmem [#allocation3], %s116
          %s118 = smul.u32 2, %s15
          %s120 = ssub.s32 256, 256
          %121 = vsyncadd %s114, %s120
          %s122 = smul.addr %s118, 128
          %s123 = scalar_lea.hbm %s1, %s122
          %s124 = sshll.u32 %s117, 4
          %s125 = int_to_ptr.vmem [resolvable:$true] %s124
          %130 = dma.hbm_to_vmem [thread:$0]  %s123, 256, %s125, %s114, 128, 128, 8
        $region24: #{tpu_custom_call.1} parent=19 // pred_fallthru
          _
      $region20: #{tpu_custom_call.1} parent=5 // pred_fallthru
        _
      %p131 = scmp.le.s32.totalorder 1, %s15
      %p132 = scmp.lt.s32.totalorder %s15, 5
      %p133 = pnand %p131, %p132
      %p134 = pneg %p133
      // Predicated region
      $region25: #{tpu_custom_call.1} parent=5 // pred_check
        _
      $region26: #{tpu_custom_call.1} parent=5 // pred_check_branch
        %136 = sbr.rel (%p133) target = $region28
      $region27: #{tpu_custom_call.1} parent=5 // pred_region
        %s137 = ssub.s32 %s15, 1
        %s138 = sand.u32 %s49, 1
        %s139 = scalar_lea.sflag [#allocation4], %s138
        %s140 = sand.u32 %s49, 1
        %s141 = smul.addr %s140, 16
        %s142 = scalar_lea.vmem [#allocation3], %s141
        // Predicated region
        $region29: #{tpu_custom_call.1} parent=27 // pred_check
          %p143 = pneg %p62
        $region30: #{tpu_custom_call.1} parent=27 // pred_check_branch
          %145 = sbr.rel (%p143) target = $region32
        $region31: #{tpu_custom_call.1} parent=27 // pred_region
          %146 = dma.done %s139, 256
        $region32: #{tpu_custom_call.1} parent=27 // pred_fallthru
          _
        %p147 = pneg %p36
        %p148 = pneg %p33
        %s149 = sand.u32 %s49, 1
        %s150 = scalar_lea.sflag [#allocation4], %s149
        %s151 = sand.u32 %s49, 1
        %s152 = smul.addr %s151, 16
        %s153 = scalar_lea.vmem [#allocation3], %s152
        %p154 = pneg %p62
        %p155 = pneg %p59
        %p156 = pneg %p88
        %p157 = pneg %p85
        %s158 = sand.u32 %s75, 1
        %s159 = scalar_lea.sflag [#allocation5], %s158
        %s160 = sand.u32 %s75, 1
        %s161 = smul.addr %s160, 16
        %s162 = scalar_lea.vmem [#allocation6], %s161
        %s163 = smul.u32 2, %s20
        %s164 = smul.u32 2, %s20
        %v165 = vld [vmem:[%s142] sm:$0xff]
        %v166 = vld [vmem:[%s142 + $0x8] sm:$0xff]
        %s167 = sld [smem:[#allocation2]]
        %v168 = vstv %s167
        %v169 = vadd.f32 %v165, %v168
        %v170 = vadd.f32 %v166, %v168
        %v171 = vxor.u32 %v169, 2147483648
        %v172 = vxor.u32 %v170, 2147483648
        %v173 = vmul.f32 %v171, 1.442695
        %v174 = vpow.pop %v173
        %v175 = vmul.f32 %v172, 1.442695
        %v176 = vpow.pop %v175
        %v177 = vadd.f32 %v174, 1.0
        %v178 = vadd.f32 %v176, 1.0
        %v179 = vrcp.pop %v177
        %v180 = vmul.f32 1.0, %v179
        %v181 = vrcp.pop %v178
        %v182 = vmul.f32 1.0, %v181
        %183 = vst [vmem:[%s162] sm:$0xff] %v180
        %184 = vst [vmem:[%s162 + $0x8] sm:$0xff] %v182
        %s185 = sand.u32 %s75, 1
        %s186 = scalar_lea.sflag [#allocation5], %s185
        %s187 = sand.u32 %s75, 1
        %s188 = smul.addr %s187, 16
        %s189 = scalar_lea.vmem [#allocation6], %s188
        // Predicated region
        $region33: #{tpu_custom_call.1} parent=27 // pred_check
          %p190 = pneg %p85
        $region34: #{tpu_custom_call.1} parent=27 // pred_check_branch
          %192 = sbr.rel (%p190) target = $region36
        $region35: #{tpu_custom_call.1} parent=27 // pred_region
          %s193 = smul.u32 2, %s20
          %s195 = ssub.s32 256, 256
          %196 = vsyncadd %s186, %s195
          %s197 = smul.addr %s193, 128
          %s198 = scalar_lea.hbm %s2, %s197
          %s199 = sshll.u32 %s189, 4
          %s200 = int_to_ptr.vmem [resolvable:$true] %s199
          %205 = dma.vmem_to_hbm [thread:$0]  %s200, 256, %s198, %s186, 128, 128, 8
        $region36: #{tpu_custom_call.1} parent=27 // pred_fallthru
          _
      $region28: #{tpu_custom_call.1} parent=5 // pred_fallthru
        _
      %p206 = scmp.le.s32.totalorder 2, %s15
      // Predicated region
      $region37: #{tpu_custom_call.1} parent=5 // pred_check
        %p207 = pneg %p206
      $region38: #{tpu_custom_call.1} parent=5 // pred_check_branch
        %209 = sbr.rel (%p207) target = $region40
      $region39: #{tpu_custom_call.1} parent=5 // pred_region
        %s210 = ssub.s32 %s15, 2
        // Predicated region
        $region41: #{tpu_custom_call.1} parent=39 // pred_check
          %p211 = pneg %p91
        $region42: #{tpu_custom_call.1} parent=39 // pred_check_branch
          %213 = sbr.rel (%p211) target = $region44
        $region43: #{tpu_custom_call.1} parent=39 // pred_region
          %s214 = sand.u32 %s76, 1
          %s215 = scalar_lea.sflag [#allocation5], %s214
          %s216 = sand.u32 %s76, 1
          %s217 = smul.addr %s216, 16
          %s218 = scalar_lea.vmem [#allocation6], %s217
          %219 = dma.done %s215, 256
        $region44: #{tpu_custom_call.1} parent=39 // pred_fallthru
          _
      $region40: #{tpu_custom_call.1} parent=5 // pred_fallthru
        _
    $region6: #{tpu_custom_call.1} parent=1 // loop_footer
      %s19 = sadd.s32 1, %s15
    $region7: #{tpu_custom_call.1} parent=1 // loop_footer_branch
      %14 = sbr.rel target = $region3
    $region8: #{tpu_custom_call.1} parent=1 // loop_exit
      _
    %220 = vsyncpa [#allocation4], 1
    %s221 = scalar_lea.sflag [#allocation4], 1
    %222 = vsyncpa %s221, 1
    %223 = vsyncpa [#allocation5], 1
    %s224 = scalar_lea.sflag [#allocation5], 1
    %225 = vsyncpa %s224, 1

</llo_original>
